<compile_context>
chip_gen: v7x
topology: tpu7x:2x2x1
jax: 0.10.0
libtpu: 0.0.40
codegen_flags: <defaults>
</compile_context>

<pallas_src>
import jax
import jax.numpy as jnp
import numpy as np
from jax.experimental import pallas as pl
from jax.experimental.pallas import tpu as pltpu

EPS = 1e-5
LANE = 128
SUBLANE = 8


def _round_up(n, m):
    return (n + m - 1) // m * m


def _make_kernel(b_true, b_pad):
    """Build the fused MLP kernel with static batch sizes baked in."""
    inv_b = np.float32(1.0 / b_true)
    need_mask = b_pad != b_true

    def kernel(x_ref, u_ref, r_ref,
               w1x_ref, w1u_ref, w1r_ref, b1_ref, g1_ref, be1_ref,
               w2_ref, b2_ref, g2_ref, be2_ref,
               w3_ref, b3_ref,
               o_ref):
        # --- fc1: split-weight form of cat((x,u,r),1) @ W1 + b1 -------------
        h = (jnp.dot(x_ref[...], w1x_ref[...], preferred_element_type=jnp.float32)
             + jnp.dot(u_ref[...], w1u_ref[...], preferred_element_type=jnp.float32)
             + jnp.dot(r_ref[...], w1r_ref[...], preferred_element_type=jnp.float32)
             + b1_ref[...])

        if need_mask:
            row_mask = (jax.lax.broadcasted_iota(jnp.int32, (b_pad, 1), 0)
                        < b_true).astype(jnp.float32)
        else:
            row_mask = None

        def bn_relu(h, gamma, beta):
            # one reduction pass: E[h], E[h^2]; padded batch rows masked out.
            if row_mask is not None:
                hm = h * row_mask
                mean = jnp.sum(hm, axis=0, keepdims=True) * inv_b
                ex2 = jnp.sum(hm * h, axis=0, keepdims=True) * inv_b
            else:
                mean = jnp.sum(h, axis=0, keepdims=True) * inv_b
                ex2 = jnp.sum(h * h, axis=0, keepdims=True) * inv_b
            var = ex2 - mean * mean                       # biased variance
            scale = gamma * jax.lax.rsqrt(var + EPS)      # fold gamma into scale
            shift = beta - mean * scale                   # fold mean/beta into shift
            return jnp.maximum(h * scale + shift, 0.0)

        h = bn_relu(h, g1_ref[...], be1_ref[...])

        # --- fc2 + bn2 + relu ------------------------------------------------
        h = jnp.dot(h, w2_ref[...], preferred_element_type=jnp.float32) + b2_ref[...]
        h = bn_relu(h, g2_ref[...], be2_ref[...])

        # --- fc3 (lane-dense 128-wide output) --------------------------------
        o_ref[...] = (jnp.dot(h, w3_ref[...], preferred_element_type=jnp.float32)
                      + b3_ref[...]).astype(o_ref.dtype)

    return kernel


def system_identification_forward(x, u, r, padded_params, state_dim):
    """x:(B,state), u:(B,control), r:(B,reff) -> (B, state_dim)."""
    x = x.astype(jnp.float32)
    u = u.astype(jnp.float32)
    r = r.astype(jnp.float32)

    B = x.shape[0]
    B_pad = _round_up(B, SUBLANE)
    if B_pad != B:
        pad = ((0, B_pad - B), (0, 0))
        x = jnp.pad(x, pad)
        u = jnp.pad(u, pad)
        r = jnp.pad(r, pad)

    out_p = padded_params["w3"].shape[1]   # state_dim rounded up to 128

    args = (x, u, r,
            padded_params["w1x"], padded_params["w1u"], padded_params["w1r"],
            padded_params["b1"], padded_params["g1"], padded_params["be1"],
            padded_params["w2"], padded_params["b2"],
            padded_params["g2"], padded_params["be2"],
            padded_params["w3"], padded_params["b3"])

    vmem = pl.BlockSpec(memory_space=pltpu.MemorySpace.VMEM)
    out = pl.pallas_call(
        _make_kernel(B, B_pad),
        out_shape=jax.ShapeDtypeStruct((B_pad, out_p), jnp.float32),
        in_specs=[vmem] * len(args),
        out_specs=vmem,
    )(*args)
    return out[:B, :state_dim]


def init_params(key, reff_dim, state_dim, control_dim, hidden_dim):
    """Logical (unpadded) parameters; Linear weights stored as (in, out)."""
    in_dim = reff_dim + state_dim + control_dim
    ks = jax.random.split(key, 6)

    def linear(kw, kb, fan_in, fan_out):
        bound = 1.0 / np.sqrt(fan_in)
        w = jax.random.uniform(kw, (fan_in, fan_out), jnp.float32, -bound, bound)
        b = jax.random.uniform(kb, (1, fan_out), jnp.float32, -bound, bound)
        return w, b

    w1, b1 = linear(ks[0], ks[1], in_dim, hidden_dim)
    w2, b2 = linear(ks[2], ks[3], hidden_dim, hidden_dim)
    w3, b3 = linear(ks[4], ks[5], hidden_dim, state_dim)
    return {
        "w1": w1, "b1": b1,
        "g1": jnp.ones((1, hidden_dim), jnp.float32),
        "be1": jnp.zeros((1, hidden_dim), jnp.float32),
        "w2": w2, "b2": b2,
        "g2": jnp.ones((1, hidden_dim), jnp.float32),
        "be2": jnp.zeros((1, hidden_dim), jnp.float32),
        "w3": w3, "b3": b3,
    }


def pad_params(p, state_dim, control_dim, reff_dim):
    """Zero-pad all feature dims to 128 lanes and split w1 by input (done once)."""
    hidden_dim = p["w2"].shape[0]
    out_dim = p["w3"].shape[1]
    hid_p = _round_up(hidden_dim, LANE)
    out_p = _round_up(out_dim, LANE)

    def pad2(a, rows, cols):
        return jnp.pad(a, ((0, rows - a.shape[0]), (0, cols - a.shape[1])))

    w1 = p["w1"]                                # rows follow cat((x, u, r), 1)
    w1x = w1[:state_dim]
    w1u = w1[state_dim:state_dim + control_dim]
    w1r = w1[state_dim + control_dim:]

    return {
        "w1x": pad2(w1x, w1x.shape[0], hid_p),
        "w1u": pad2(w1u, w1u.shape[0], hid_p),
        "w1r": pad2(w1r, w1r.shape[0], hid_p),
        "b1": pad2(p["b1"], 1, hid_p),
        "g1": pad2(p["g1"], 1, hid_p),          # zero gamma on padded lanes
        "be1": pad2(p["be1"], 1, hid_p),
        "w2": pad2(p["w2"], hid_p, hid_p),
        "b2": pad2(p["b2"], 1, hid_p),
        "g2": pad2(p["g2"], 1, hid_p),
        "be2": pad2(p["be2"], 1, hid_p),
        "w3": pad2(p["w3"], hid_p, out_p),
        "b3": pad2(p["b3"], 1, out_p),
    }


def _reference(x, u, r, p):
    """Pure-JAX reference on the logical (unpadded) parameters."""
    y = jnp.concatenate([x, u, r], axis=1)

    def bn(h, g, be):
        m = jnp.mean(h, axis=0, keepdims=True)
        v = jnp.mean((h - m) ** 2, axis=0, keepdims=True)
        return (h - m) / jnp.sqrt(v + EPS) * g + be

    h = jax.nn.relu(bn(y @ p["w1"] + p["b1"], p["g1"], p["be1"]))
    h = jax.nn.relu(bn(h @ p["w2"] + p["b2"], p["g2"], p["be2"]))
    return h @ p["w3"] + p["b3"]


if __name__ == "__main__":
    reff_dim, state_dim, control_dim, hidden_dim = 4, 4, 2, 32
    B = 8

    key = jax.random.PRNGKey(0)
    kx, ku, kr, kp = jax.random.split(key, 4)
    x = jax.random.normal(kx, (B, state_dim), jnp.float32)
    u = jax.random.normal(ku, (B, control_dim), jnp.float32)
    r = jax.random.normal(kr, (B, reff_dim), jnp.float32)

    params = init_params(kp, reff_dim, state_dim, control_dim, hidden_dim)
    padded = pad_params(params, state_dim, control_dim, reff_dim)

    out = system_identification_forward(x, u, r, padded, state_dim)
    out = jax.block_until_ready(out)

    ref = _reference(x, u, r, params)
    assert out.shape == (B, state_dim)
    assert np.allclose(np.asarray(out), np.asarray(ref), rtol=1e-4, atol=1e-4)

    print("KERNEL_OK")
</pallas_src>

<mosaic_0001>
module attributes {stable_mosaic.version = 11 : i64} {
  func.func @kernel(%arg0: memref<8x4xf32, #tpu.memory_space<vmem>>, %arg1: memref<8x2xf32, #tpu.memory_space<vmem>>, %arg2: memref<8x4xf32, #tpu.memory_space<vmem>>, %arg3: memref<4x128xf32, #tpu.memory_space<vmem>>, %arg4: memref<2x128xf32, #tpu.memory_space<vmem>>, %arg5: memref<4x128xf32, #tpu.memory_space<vmem>>, %arg6: memref<1x128xf32, #tpu.memory_space<vmem>>, %arg7: memref<1x128xf32, #tpu.memory_space<vmem>>, %arg8: memref<1x128xf32, #tpu.memory_space<vmem>>, %arg9: memref<128x128xf32, #tpu.memory_space<vmem>>, %arg10: memref<1x128xf32, #tpu.memory_space<vmem>>, %arg11: memref<1x128xf32, #tpu.memory_space<vmem>>, %arg12: memref<1x128xf32, #tpu.memory_space<vmem>>, %arg13: memref<128x128xf32, #tpu.memory_space<vmem>>, %arg14: memref<1x128xf32, #tpu.memory_space<vmem>>, %arg15: memref<8x128xf32, #tpu.memory_space<vmem>>) attributes {dimension_semantics = [], scalar_prefetch = 0 : i64, scratch_operands = 0 : i64, tpu.core_type = #tpu.core_type<tc>} {
    %c0 = arith.constant 0 : index
    %c0_0 = arith.constant 0 : index
    %0 = vector.load %arg0[%c0, %c0_0] : memref<8x4xf32, #tpu.memory_space<vmem>>, vector<8x4xf32>
    %c0_1 = arith.constant 0 : index
    %c0_2 = arith.constant 0 : index
    %1 = vector.load %arg3[%c0_1, %c0_2] : memref<4x128xf32, #tpu.memory_space<vmem>>, vector<4x128xf32>
    %cst = arith.constant dense<0.000000e+00> : vector<8x128xf32>
    %2 = tpu.matmul %0, %1, %cst {dimension_numbers = #tpu.dot_dimension_numbers<[1], [0], [0], [1], [0, 0, 1, 1], [], []>} : vector<8x4xf32>, vector<4x128xf32>, vector<8x128xf32> -> vector<8x128xf32>
    %c0_3 = arith.constant 0 : index
    %c0_4 = arith.constant 0 : index
    %3 = vector.load %arg1[%c0_3, %c0_4] : memref<8x2xf32, #tpu.memory_space<vmem>>, vector<8x2xf32>
    %c0_5 = arith.constant 0 : index
    %c0_6 = arith.constant 0 : index
    %4 = vector.load %arg4[%c0_5, %c0_6] : memref<2x128xf32, #tpu.memory_space<vmem>>, vector<2x128xf32>
    %cst_7 = arith.constant dense<0.000000e+00> : vector<8x128xf32>
    %5 = tpu.matmul %3, %4, %cst_7 {dimension_numbers = #tpu.dot_dimension_numbers<[1], [0], [0], [1], [0, 0, 1, 1], [], []>} : vector<8x2xf32>, vector<2x128xf32>, vector<8x128xf32> -> vector<8x128xf32>
    %6 = arith.addf %2, %5 : vector<8x128xf32>
    %c0_8 = arith.constant 0 : index
    %c0_9 = arith.constant 0 : index
    %7 = vector.load %arg2[%c0_8, %c0_9] : memref<8x4xf32, #tpu.memory_space<vmem>>, vector<8x4xf32>
    %c0_10 = arith.constant 0 : index
    %c0_11 = arith.constant 0 : index
    %8 = vector.load %arg5[%c0_10, %c0_11] : memref<4x128xf32, #tpu.memory_space<vmem>>, vector<4x128xf32>
    %cst_12 = arith.constant dense<0.000000e+00> : vector<8x128xf32>
    %9 = tpu.matmul %7, %8, %cst_12 {dimension_numbers = #tpu.dot_dimension_numbers<[1], [0], [0], [1], [0, 0, 1, 1], [], []>} : vector<8x4xf32>, vector<4x128xf32>, vector<8x128xf32> -> vector<8x128xf32>
    %10 = arith.addf %6, %9 : vector<8x128xf32>
    %c0_13 = arith.constant 0 : index
    %c0_14 = arith.constant 0 : index
    %11 = vector.load %arg6[%c0_13, %c0_14] : memref<1x128xf32, #tpu.memory_space<vmem>>, vector<1x128xf32>
    %12 = vector.broadcast %11 : vector<1x128xf32> to vector<8x128xf32>
    %13 = arith.addf %10, %12 : vector<8x128xf32>
    %c0_15 = arith.constant 0 : index
    %c0_16 = arith.constant 0 : index
    %14 = vector.load %arg7[%c0_15, %c0_16] : memref<1x128xf32, #tpu.memory_space<vmem>>, vector<1x128xf32>
    %c0_17 = arith.constant 0 : index
    %c0_18 = arith.constant 0 : index
    %15 = vector.load %arg8[%c0_17, %c0_18] : memref<1x128xf32, #tpu.memory_space<vmem>>, vector<1x128xf32>
    %cst_19 = arith.constant dense<0.000000e+00> : vector<128xf32>
    %16 = vector.multi_reduction <add>, %13, %cst_19 [0] : vector<8x128xf32> to vector<128xf32>
    %17 = vector.shape_cast %16 : vector<128xf32> to vector<1x128xf32>
    %cst_20 = arith.constant 1.250000e-01 : f32
    %18 = vector.broadcast %cst_20 : f32 to vector<1x128xf32>
    %19 = arith.mulf %17, %18 : vector<1x128xf32>
    %20 = arith.mulf %13, %13 : vector<8x128xf32>
    %cst_21 = arith.constant dense<0.000000e+00> : vector<128xf32>
    %21 = vector.multi_reduction <add>, %20, %cst_21 [0] : vector<8x128xf32> to vector<128xf32>
    %22 = vector.shape_cast %21 : vector<128xf32> to vector<1x128xf32>
    %cst_22 = arith.constant 1.250000e-01 : f32
    %23 = vector.broadcast %cst_22 : f32 to vector<1x128xf32>
    %24 = arith.mulf %22, %23 : vector<1x128xf32>
    %25 = arith.mulf %19, %19 : vector<1x128xf32>
    %26 = arith.subf %24, %25 : vector<1x128xf32>
    %cst_23 = arith.constant 9.99999974E-6 : f32
    %27 = vector.broadcast %cst_23 : f32 to vector<1x128xf32>
    %28 = arith.addf %26, %27 : vector<1x128xf32>
    %29 = math.rsqrt %28 : vector<1x128xf32>
    %30 = arith.mulf %14, %29 : vector<1x128xf32>
    %31 = arith.mulf %19, %30 : vector<1x128xf32>
    %32 = arith.subf %15, %31 : vector<1x128xf32>
    %33 = vector.broadcast %30 : vector<1x128xf32> to vector<8x128xf32>
    %34 = arith.mulf %13, %33 : vector<8x128xf32>
    %35 = vector.broadcast %32 : vector<1x128xf32> to vector<8x128xf32>
    %36 = arith.addf %34, %35 : vector<8x128xf32>
    %cst_24 = arith.constant 0.000000e+00 : f32
    %37 = vector.broadcast %cst_24 : f32 to vector<8x128xf32>
    %38 = arith.maximumf %36, %37 : vector<8x128xf32>
    %c0_25 = arith.constant 0 : index
    %c0_26 = arith.constant 0 : index
    %39 = vector.load %arg9[%c0_25, %c0_26] : memref<128x128xf32, #tpu.memory_space<vmem>>, vector<128x128xf32>
    %cst_27 = arith.constant dense<0.000000e+00> : vector<8x128xf32>
    %40 = tpu.matmul %38, %39, %cst_27 {dimension_numbers = #tpu.dot_dimension_numbers<[1], [0], [0], [1], [0, 0, 1, 1], [], []>} : vector<8x128xf32>, vector<128x128xf32>, vector<8x128xf32> -> vector<8x128xf32>
    %c0_28 = arith.constant 0 : index
    %c0_29 = arith.constant 0 : index
    %41 = vector.load %arg10[%c0_28, %c0_29] : memref<1x128xf32, #tpu.memory_space<vmem>>, vector<1x128xf32>
    %42 = vector.broadcast %41 : vector<1x128xf32> to vector<8x128xf32>
    %43 = arith.addf %40, %42 : vector<8x128xf32>
    %c0_30 = arith.constant 0 : index
    %c0_31 = arith.constant 0 : index
    %44 = vector.load %arg11[%c0_30, %c0_31] : memref<1x128xf32, #tpu.memory_space<vmem>>, vector<1x128xf32>
    %c0_32 = arith.constant 0 : index
    %c0_33 = arith.constant 0 : index
    %45 = vector.load %arg12[%c0_32, %c0_33] : memref<1x128xf32, #tpu.memory_space<vmem>>, vector<1x128xf32>
    %cst_34 = arith.constant dense<0.000000e+00> : vector<128xf32>
    %46 = vector.multi_reduction <add>, %43, %cst_34 [0] : vector<8x128xf32> to vector<128xf32>
    %47 = vector.shape_cast %46 : vector<128xf32> to vector<1x128xf32>
    %cst_35 = arith.constant 1.250000e-01 : f32
    %48 = vector.broadcast %cst_35 : f32 to vector<1x128xf32>
    %49 = arith.mulf %47, %48 : vector<1x128xf32>
    %50 = arith.mulf %43, %43 : vector<8x128xf32>
    %cst_36 = arith.constant dense<0.000000e+00> : vector<128xf32>
    %51 = vector.multi_reduction <add>, %50, %cst_36 [0] : vector<8x128xf32> to vector<128xf32>
    %52 = vector.shape_cast %51 : vector<128xf32> to vector<1x128xf32>
    %cst_37 = arith.constant 1.250000e-01 : f32
    %53 = vector.broadcast %cst_37 : f32 to vector<1x128xf32>
    %54 = arith.mulf %52, %53 : vector<1x128xf32>
    %55 = arith.mulf %49, %49 : vector<1x128xf32>
    %56 = arith.subf %54, %55 : vector<1x128xf32>
    %cst_38 = arith.constant 9.99999974E-6 : f32
    %57 = vector.broadcast %cst_38 : f32 to vector<1x128xf32>
    %58 = arith.addf %56, %57 : vector<1x128xf32>
    %59 = math.rsqrt %58 : vector<1x128xf32>
    %60 = arith.mulf %44, %59 : vector<1x128xf32>
    %61 = arith.mulf %49, %60 : vector<1x128xf32>
    %62 = arith.subf %45, %61 : vector<1x128xf32>
    %63 = vector.broadcast %60 : vector<1x128xf32> to vector<8x128xf32>
    %64 = arith.mulf %43, %63 : vector<8x128xf32>
    %65 = vector.broadcast %62 : vector<1x128xf32> to vector<8x128xf32>
    %66 = arith.addf %64, %65 : vector<8x128xf32>
    %cst_39 = arith.constant 0.000000e+00 : f32
    %67 = vector.broadcast %cst_39 : f32 to vector<8x128xf32>
    %68 = arith.maximumf %66, %67 : vector<8x128xf32>
    %c0_40 = arith.constant 0 : index
    %c0_41 = arith.constant 0 : index
    %69 = vector.load %arg13[%c0_40, %c0_41] : memref<128x128xf32, #tpu.memory_space<vmem>>, vector<128x128xf32>
    %cst_42 = arith.constant dense<0.000000e+00> : vector<8x128xf32>
    %70 = tpu.matmul %68, %69, %cst_42 {dimension_numbers = #tpu.dot_dimension_numbers<[1], [0], [0], [1], [0, 0, 1, 1], [], []>} : vector<8x128xf32>, vector<128x128xf32>, vector<8x128xf32> -> vector<8x128xf32>
    %c0_43 = arith.constant 0 : index
    %c0_44 = arith.constant 0 : index
    %71 = vector.load %arg14[%c0_43, %c0_44] : memref<1x128xf32, #tpu.memory_space<vmem>>, vector<1x128xf32>
    %72 = vector.broadcast %71 : vector<1x128xf32> to vector<8x128xf32>
    %73 = arith.addf %70, %72 : vector<8x128xf32>
    %c0_45 = arith.constant 0 : index
    %c0_46 = arith.constant 0 : index
    %74 = vector.load %arg15[%c0_45, %c0_46] : memref<8x128xf32, #tpu.memory_space<vmem>>, vector<8x128xf32>
    tpu.vector_store %arg15[%c0_45, %c0_46], %73 {strides = array<i32>} : memref<8x128xf32, #tpu.memory_space<vmem>>, vector<8x128xf32>,
    return
  }
}

</mosaic_0001>

<llo_original>
// kernel: tpu_custom_call.1
$region0: #{tpu_custom_call.1}
  #allocation0 [shape = 'u32[]', space=smem, size = 0x4, offset = 0x4, fixed_abs, tag = 'smem constant byte address 0x4 - core index']
  #allocation1 [shape = 'u32[144,128]{1,0:T(1,128)}', space=vmem, size = 0x12000, scoped, tag = 'internal scratch']
  %s0 = inlined_call_operand.vmem [shape: f32[8,4], index: 0, kind: input, shape index: {}]
  %s1 = inlined_call_operand.vmem [shape: f32[8,2], index: 1, kind: input, shape index: {}]
  %s2 = inlined_call_operand.vmem [shape: f32[8,4], index: 2, kind: input, shape index: {}]
  %s3 = inlined_call_operand.vmem [shape: f32[4,128], index: 3, kind: input, shape index: {}]
  %s4 = inlined_call_operand.vmem [shape: f32[2,128], index: 4, kind: input, shape index: {}]
  %s5 = inlined_call_operand.vmem [shape: f32[4,128], index: 5, kind: input, shape index: {}]
  %s6 = inlined_call_operand.vmem [shape: f32[1,128], index: 6, kind: input, shape index: {}]
  %s7 = inlined_call_operand.vmem [shape: f32[1,128], index: 7, kind: input, shape index: {}]
  %s8 = inlined_call_operand.vmem [shape: f32[1,128], index: 8, kind: input, shape index: {}]
  %s9 = inlined_call_operand.hbm [shape: f32[128,128], index: 9, kind: input, shape index: {}]
  %s10 = inlined_call_operand.vmem [shape: f32[1,128], index: 10, kind: input, shape index: {}]
  %s11 = inlined_call_operand.vmem [shape: f32[1,128], index: 11, kind: input, shape index: {}]
  %s12 = inlined_call_operand.vmem [shape: f32[1,128], index: 12, kind: input, shape index: {}]
  %s13 = inlined_call_operand.hbm [shape: f32[128,128], index: 13, kind: input, shape index: {}]
  %s14 = inlined_call_operand.vmem [shape: f32[1,128], index: 14, kind: input, shape index: {}]
  %s15 = inlined_call_operand.hbm [shape: f32[8,128], index: 15, kind: output, shape index: {}]
  %s16 = sld [smem:[#allocation0]]
  $region78: #{tpu_custom_call.1} parent=0
    _
  %s18 = ssub.s32 1, %s16
  %s19 = scalar_select 0, %s18, %s16
  $region1: #{tpu_custom_call.1} parent=0
    #allocation2 [shape = 'u8[65536]{0}', space=vmem, size = 0x10000, scoped, tag = 'input window, operand 9, single buffered']
    #allocation3 [shape = 's32[1]{0}', space=sflag, size = 0x4, scoped, tag = 'scoped memory for tpu_custom_call.1']
    #allocation4 [shape = 's32[1]{0}', space=sflag, size = 0x4, scoped, tag = 'scoped memory for tpu_custom_call.1']
    #allocation5 [shape = 'u8[65536]{0}', space=vmem, size = 0x10000, scoped, tag = 'input window, operand 13, single buffered']
    #allocation6 [shape = 's32[1]{0}', space=sflag, size = 0x4, scoped, tag = 'scoped memory for tpu_custom_call.1']
    #allocation7 [shape = 'u8[4096]{0}', space=vmem, size = 0x1000, scoped, tag = 'output window, operand 0, single buffered']
    %20 = vsyncpa [#allocation3], 0
    %21 = vsyncpa [#allocation6], 0
    %22 = vsyncpa [#allocation4], 0
    // Predicated region
    $region2: #{tpu_custom_call.1} parent=1 // pred_check
      _
    $region3: #{tpu_custom_call.1} parent=1 // pred_check_branch
      %24 = sbr.rel (0) target = $region5
    $region4: #{tpu_custom_call.1} parent=1 // pred_region
      _
    $region5: #{tpu_custom_call.1} parent=1 // pred_fallthru
      _
    // Predicated region
    $region6: #{tpu_custom_call.1} parent=1 // pred_check
      _
    $region7: #{tpu_custom_call.1} parent=1 // pred_check_branch
      %26 = sbr.rel (0) target = $region9
    $region8: #{tpu_custom_call.1} parent=1 // pred_region
      _
    $region9: #{tpu_custom_call.1} parent=1 // pred_fallthru
      _
    // Predicated region
    $region10: #{tpu_custom_call.1} parent=1 // pred_check
      _
    $region11: #{tpu_custom_call.1} parent=1 // pred_check_branch
      %28 = sbr.rel (0) target = $region13
    $region12: #{tpu_custom_call.1} parent=1 // pred_region
      _
    $region13: #{tpu_custom_call.1} parent=1 // pred_fallthru
      _
    // Predicated region
    $region14: #{tpu_custom_call.1} parent=1 // pred_check
      _
    $region15: #{tpu_custom_call.1} parent=1 // pred_check_branch
      %30 = sbr.rel (0) target = $region17
    $region16: #{tpu_custom_call.1} parent=1 // pred_region
      _
    $region17: #{tpu_custom_call.1} parent=1 // pred_fallthru
      _
    // Predicated region
    $region18: #{tpu_custom_call.1} parent=1 // pred_check
      _
    $region19: #{tpu_custom_call.1} parent=1 // pred_check_branch
      %32 = sbr.rel (0) target = $region21
    $region20: #{tpu_custom_call.1} parent=1 // pred_region
      _
    $region21: #{tpu_custom_call.1} parent=1 // pred_fallthru
      _
    // Predicated region
    $region22: #{tpu_custom_call.1} parent=1 // pred_check
      _
    $region23: #{tpu_custom_call.1} parent=1 // pred_check_branch
      %34 = sbr.rel (0) target = $region25
    $region24: #{tpu_custom_call.1} parent=1 // pred_region
      _
    $region25: #{tpu_custom_call.1} parent=1 // pred_fallthru
      _
    // Predicated region
    $region26: #{tpu_custom_call.1} parent=1 // pred_check
      _
    $region27: #{tpu_custom_call.1} parent=1 // pred_check_branch
      %36 = sbr.rel (0) target = $region29
    $region28: #{tpu_custom_call.1} parent=1 // pred_region
      _
    $region29: #{tpu_custom_call.1} parent=1 // pred_fallthru
      _
    // Predicated region
    $region30: #{tpu_custom_call.1} parent=1 // pred_check
      _
    $region31: #{tpu_custom_call.1} parent=1 // pred_check_branch
      %38 = sbr.rel (0) target = $region33
    $region32: #{tpu_custom_call.1} parent=1 // pred_region
      _
    $region33: #{tpu_custom_call.1} parent=1 // pred_fallthru
      _
    // Predicated region
    $region34: #{tpu_custom_call.1} parent=1 // pred_check
      _
    $region35: #{tpu_custom_call.1} parent=1 // pred_check_branch
      %40 = sbr.rel (0) target = $region37
    $region36: #{tpu_custom_call.1} parent=1 // pred_region
      _
    $region37: #{tpu_custom_call.1} parent=1 // pred_fallthru
      _
    // Predicated region
    $region38: #{tpu_custom_call.1} parent=1 // pred_check
      _
    $region39: #{tpu_custom_call.1} parent=1 // pred_check_branch
      %42 = sbr.rel (0) target = $region41
    $region40: #{tpu_custom_call.1} parent=1 // pred_region
      %s44 = ssub.s32 2048, 2048
      %45 = vsyncadd [#allocation3], %s44
      %s46 = sshll.u32 [#allocation2], 4
      %s47 = int_to_ptr.vmem [resolvable:$true] %s46
      %52 = dma.hbm_to_vmem [thread:$0]  %s9, 2048, %s47, [#allocation3], 128, 128, 8
    $region41: #{tpu_custom_call.1} parent=1 // pred_fallthru
      _
    // Predicated region
    $region42: #{tpu_custom_call.1} parent=1 // pred_check
      _
    $region43: #{tpu_custom_call.1} parent=1 // pred_check_branch
      %54 = sbr.rel (0) target = $region45
    $region44: #{tpu_custom_call.1} parent=1 // pred_region
      _
    $region45: #{tpu_custom_call.1} parent=1 // pred_fallthru
      _
    // Predicated region
    $region46: #{tpu_custom_call.1} parent=1 // pred_check
      _
    $region47: #{tpu_custom_call.1} parent=1 // pred_check_branch
      %56 = sbr.rel (0) target = $region49
    $region48: #{tpu_custom_call.1} parent=1 // pred_region
      _
    $region49: #{tpu_custom_call.1} parent=1 // pred_fallthru
      _
    // Predicated region
    $region50: #{tpu_custom_call.1} parent=1 // pred_check
      _
    $region51: #{tpu_custom_call.1} parent=1 // pred_check_branch
      %58 = sbr.rel (0) target = $region53
    $region52: #{tpu_custom_call.1} parent=1 // pred_region
      _
    $region53: #{tpu_custom_call.1} parent=1 // pred_fallthru
      _
    // Predicated region
    $region54: #{tpu_custom_call.1} parent=1 // pred_check
      _
    $region55: #{tpu_custom_call.1} parent=1 // pred_check_branch
      %60 = sbr.rel (0) target = $region57
    $region56: #{tpu_custom_call.1} parent=1 // pred_region
      %s62 = ssub.s32 2048, 2048
      %63 = vsyncadd [#allocation6], %s62
      %s64 = sshll.u32 [#allocation5], 4
      %s65 = int_to_ptr.vmem [resolvable:$true] %s64
      %70 = dma.hbm_to_vmem [thread:$0]  %s13, 2048, %s65, [#allocation6], 128, 128, 8
    $region57: #{tpu_custom_call.1} parent=1 // pred_fallthru
      _
    // Predicated region
    $region58: #{tpu_custom_call.1} parent=1 // pred_check
      _
    $region59: #{tpu_custom_call.1} parent=1 // pred_check_branch
      %72 = sbr.rel (0) target = $region61
    $region60: #{tpu_custom_call.1} parent=1 // pred_region
      _
    $region61: #{tpu_custom_call.1} parent=1 // pred_fallthru
      _
    // Predicated region
    $region62: #{tpu_custom_call.1} parent=1 // pred_check
      _
    $region63: #{tpu_custom_call.1} parent=1 // pred_check_branch
      %74 = sbr.rel (0) target = $region65
    $region64: #{tpu_custom_call.1} parent=1 // pred_region
      %75 = dma.done [#allocation3], 2048
    $region65: #{tpu_custom_call.1} parent=1 // pred_fallthru
      _
    // Predicated region
    $region66: #{tpu_custom_call.1} parent=1 // pred_check
      _
    $region67: #{tpu_custom_call.1} parent=1 // pred_check_branch
      %77 = sbr.rel (0) target = $region69
    $region68: #{tpu_custom_call.1} parent=1 // pred_region
      %78 = dma.done [#allocation6], 2048
    $region69: #{tpu_custom_call.1} parent=1 // pred_fallthru
      _
    %v79 = vld [vmem:[%s0] sm:$0xff]
    %v80 = vld [vmem:[%s3] sm:$0xf]
    %v81 = vld [vmem:[%s1] sm:$0xff]
    %v82 = vld [vmem:[%s4] sm:$0x3]
    %vm83 = vcmask 15360
    %v85 = vsel %vm83, %v81, 0
    %vm87 = vcmask 1041408
    %v89 = vsel %vm87, %v82, 0
    %91 = vmatprep.subr.mxu0 0.0
    %92 = vmatpush1.msra.mxu0 %v89
    %93 = vmatprep.subr.mxu0 0.0
    %94 = vmatpush1.msra.mxu0 0.0
    %95 = vmatprep.subr.mxu0 0.0
    %96 = vmatpush1.msra.mxu0 0.0
    %97 = vmatprep.subr.mxu0 0.0
    %98 = vmatpush1.msra.mxu0 0.0
    %99 = vmatprep.subr.mxu0 0.0
    %100 = vmatpush1.msra.mxu0 0.0
    %101 = vmatprep.subr.mxu0 0.0
    %102 = vmatpush1.msra.mxu0 0.0
    %103 = vmatprep.subr.mxu0 0.0
    %104 = vmatpush1.msra.mxu0 0.0
    %105 = vmatprep.subr.mxu0 0.0
    %106 = vmatpush1.msra.mxu0 0.0
    %107 = vmatprep.subr.mxu0 0.0
    %108 = vmatpush1.msra.mxu0 0.0
    %109 = vmatprep.subr.mxu0 0.0
    %110 = vmatpush1.msra.mxu0 0.0
    %111 = vmatprep.subr.mxu0 0.0
    %112 = vmatpush1.msra.mxu0 0.0
    %113 = vmatprep.subr.mxu0 0.0
    %114 = vmatpush1.msra.mxu0 0.0
    %115 = vmatprep.subr.mxu0 0.0
    %116 = vmatpush1.msra.mxu0 0.0
    %117 = vmatprep.subr.mxu0 0.0
    %118 = vmatpush1.msra.mxu0 0.0
    %119 = vmatprep.subr.mxu0 0.0
    %120 = vmatpush1.msra.mxu0 0.0
    %121 = vmatprep.subr.mxu0 0.0
    %122 = vmatpush1.msra.mxu0 0.0
    %123 = vmatprep.subr.mxu0 0.0
    %124 = vmatpush1.msra.mxu0 0.0
    %125 = vmatprep.subr.mxu0 0.0
    %126 = vmatpush1.msra.mxu0 0.0
    %127 = vmatprep.subr.mxu0 0.0
    %128 = vmatpush1.msra.mxu0 0.0
    %129 = vmatprep.subr.mxu0 0.0
    %130 = vmatpush1.msra.mxu0 0.0
    %131 = vmatprep.subr.mxu0 0.0
    %132 = vmatpush1.msra.mxu0 0.0
    %133 = vmatprep.subr.mxu0 0.0
    %134 = vmatpush1.msra.mxu0 0.0
    %135 = vmatprep.subr.mxu0 0.0
    %136 = vmatpush1.msra.mxu0 0.0
    %137 = vmatprep.subr.mxu0 0.0
    %138 = vmatpush1.msra.mxu0 0.0
    %139 = vmatprep.subr.mxu0 0.0
    %140 = vmatpush1.msra.mxu0 0.0
    %141 = vmatprep.subr.mxu0 0.0
    %142 = vmatpush1.msra.mxu0 0.0
    %143 = vmatprep.subr.mxu0 0.0
    %144 = vmatpush1.msra.mxu0 0.0
    %145 = vmatprep.subr.mxu0 0.0
    %146 = vmatpush1.msra.mxu0 0.0
    %147 = vmatprep.subr.mxu0 0.0
    %148 = vmatpush1.msra.mxu0 0.0
    %149 = vmatprep.subr.mxu0 0.0
    %150 = vmatpush1.msra.mxu0 0.0
    %151 = vmatprep.subr.mxu0 0.0
    %152 = vmatpush1.msra.mxu0 0.0
    %153 = vmatprep.subr.mxu0 0.0
    %154 = vmatpush1.msra.mxu0 0.0
    %155 = vmatprep.mubr.f32.mxu0 0.0
    %156 = vmatmul.mubr.f32.gmra.mrb[0].mxu0 %v85
    %v157 = vpop.f32.mrb[0].mxu0
    %v158 = vadd.f32 0.0, %v157
    %v159 = vpop.f32.mrb[0].mxu0
    %160 = vdwg.mxu0
    %vm161 = vcmask 31744
    %v163 = vsel %vm161, %v79, 0
    %vm165 = vcmask 1043456
    %v167 = vsel %vm165, %v80, 0
    %169 = vmatprep.subr.mxu0 0.0
    %170 = vmatpush1.msra.mxu0 %v167
    %171 = vmatprep.subr.mxu0 0.0
    %172 = vmatpush1.msra.mxu0 0.0
    %173 = vmatprep.subr.mxu0 0.0
    %174 = vmatpush1.msra.mxu0 0.0
    %175 = vmatprep.subr.mxu0 0.0
    %176 = vmatpush1.msra.mxu0 0.0
    %177 = vmatprep.subr.mxu0 0.0
    %178 = vmatpush1.msra.mxu0 0.0
    %179 = vmatprep.subr.mxu0 0.0
    %180 = vmatpush1.msra.mxu0 0.0
    %181 = vmatprep.subr.mxu0 0.0
    %182 = vmatpush1.msra.mxu0 0.0
    %183 = vmatprep.subr.mxu0 0.0
    %184 = vmatpush1.msra.mxu0 0.0
    %185 = vmatprep.subr.mxu0 0.0
    %186 = vmatpush1.msra.mxu0 0.0
    %187 = vmatprep.subr.mxu0 0.0
    %188 = vmatpush1.msra.mxu0 0.0
    %189 = vmatprep.subr.mxu0 0.0
    %190 = vmatpush1.msra.mxu0 0.0
    %191 = vmatprep.subr.mxu0 0.0
    %192 = vmatpush1.msra.mxu0 0.0
    %193 = vmatprep.subr.mxu0 0.0
    %194 = vmatpush1.msra.mxu0 0.0
    %195 = vmatprep.subr.mxu0 0.0
    %196 = vmatpush1.msra.mxu0 0.0
    %197 = vmatprep.subr.mxu0 0.0
    %198 = vmatpush1.msra.mxu0 0.0
    %199 = vmatprep.subr.mxu0 0.0
    %200 = vmatpush1.msra.mxu0 0.0
    %201 = vmatprep.subr.mxu0 0.0
    %202 = vmatpush1.msra.mxu0 0.0
    %203 = vmatprep.subr.mxu0 0.0
    %204 = vmatpush1.msra.mxu0 0.0
    %205 = vmatprep.subr.mxu0 0.0
    %206 = vmatpush1.msra.mxu0 0.0
    %207 = vmatprep.subr.mxu0 0.0
    %208 = vmatpush1.msra.mxu0 0.0
    %209 = vmatprep.subr.mxu0 0.0
    %210 = vmatpush1.msra.mxu0 0.0
    %211 = vmatprep.subr.mxu0 0.0
    %212 = vmatpush1.msra.mxu0 0.0
    %213 = vmatprep.subr.mxu0 0.0
    %214 = vmatpush1.msra.mxu0 0.0
    %215 = vmatprep.subr.mxu0 0.0
    %216 = vmatpush1.msra.mxu0 0.0
    %217 = vmatprep.subr.mxu0 0.0
    %218 = vmatpush1.msra.mxu0 0.0
    %219 = vmatprep.subr.mxu0 0.0
    %220 = vmatpush1.msra.mxu0 0.0
    %221 = vmatprep.subr.mxu0 0.0
    %222 = vmatpush1.msra.mxu0 0.0
    %223 = vmatprep.subr.mxu0 0.0
    %224 = vmatpush1.msra.mxu0 0.0
    %225 = vmatprep.subr.mxu0 0.0
    %226 = vmatpush1.msra.mxu0 0.0
    %227 = vmatprep.subr.mxu0 0.0
    %228 = vmatpush1.msra.mxu0 0.0
    %229 = vmatprep.subr.mxu0 0.0
    %230 = vmatpush1.msra.mxu0 0.0
    %231 = vmatprep.subr.mxu0 0.0
    %232 = vmatpush1.msra.mxu0 0.0
    %233 = vmatprep.mubr.f32.mxu0 0.0
    %234 = vmatmul.mubr.f32.gmra.mrb[0].mxu0 %v163
    %v235 = vpop.f32.mrb[0].mxu0
    %v236 = vadd.f32 %v158, %v235
    %v237 = vpop.f32.mrb[0].mxu0
    %238 = vdwg.mxu0
    %v239 = vld [vmem:[%s2] sm:$0xff]
    %v240 = vld [vmem:[%s5] sm:$0xf]
    %v242 = vsel %vm161, %v239, 0
    %v245 = vsel %vm165, %v240, 0
    %247 = vmatprep.subr.mxu0 0.0
    %248 = vmatpush1.msra.mxu0 %v245
    %249 = vmatprep.subr.mxu0 0.0
    %250 = vmatpush1.msra.mxu0 0.0
    %251 = vmatprep.subr.mxu0 0.0
    %252 = vmatpush1.msra.mxu0 0.0
    %253 = vmatprep.subr.mxu0 0.0
    %254 = vmatpush1.msra.mxu0 0.0
    %255 = vmatprep.subr.mxu0 0.0
    %256 = vmatpush1.msra.mxu0 0.0
    %257 = vmatprep.subr.mxu0 0.0
    %258 = vmatpush1.msra.mxu0 0.0
    %259 = vmatprep.subr.mxu0 0.0
    %260 = vmatpush1.msra.mxu0 0.0
    %261 = vmatprep.subr.mxu0 0.0
    %262 = vmatpush1.msra.mxu0 0.0
    %263 = vmatprep.subr.mxu0 0.0
    %264 = vmatpush1.msra.mxu0 0.0
    %265 = vmatprep.subr.mxu0 0.0
    %266 = vmatpush1.msra.mxu0 0.0
    %267 = vmatprep.subr.mxu0 0.0
    %268 = vmatpush1.msra.mxu0 0.0
    %269 = vmatprep.subr.mxu0 0.0
    %270 = vmatpush1.msra.mxu0 0.0
    %271 = vmatprep.subr.mxu0 0.0
    %272 = vmatpush1.msra.mxu0 0.0
    %273 = vmatprep.subr.mxu0 0.0
    %274 = vmatpush1.msra.mxu0 0.0
    %275 = vmatprep.subr.mxu0 0.0
    %276 = vmatpush1.msra.mxu0 0.0
    %277 = vmatprep.subr.mxu0 0.0
    %278 = vmatpush1.msra.mxu0 0.0
    %279 = vmatprep.subr.mxu0 0.0
    %280 = vmatpush1.msra.mxu0 0.0
    %281 = vmatprep.subr.mxu0 0.0
    %282 = vmatpush1.msra.mxu0 0.0
    %283 = vmatprep.subr.mxu0 0.0
    %284 = vmatpush1.msra.mxu0 0.0
    %285 = vmatprep.subr.mxu0 0.0
    %286 = vmatpush1.msra.mxu0 0.0
    %287 = vmatprep.subr.mxu0 0.0
    %288 = vmatpush1.msra.mxu0 0.0
    %289 = vmatprep.subr.mxu0 0.0
    %290 = vmatpush1.msra.mxu0 0.0
    %291 = vmatprep.subr.mxu0 0.0
    %292 = vmatpush1.msra.mxu0 0.0
    %293 = vmatprep.subr.mxu0 0.0
    %294 = vmatpush1.msra.mxu0 0.0
    %295 = vmatprep.subr.mxu0 0.0
    %296 = vmatpush1.msra.mxu0 0.0
    %297 = vmatprep.subr.mxu0 0.0
    %298 = vmatpush1.msra.mxu0 0.0
    %299 = vmatprep.subr.mxu0 0.0
    %300 = vmatpush1.msra.mxu0 0.0
    %301 = vmatprep.subr.mxu0 0.0
    %302 = vmatpush1.msra.mxu0 0.0
    %303 = vmatprep.subr.mxu0 0.0
    %304 = vmatpush1.msra.mxu0 0.0
    %305 = vmatprep.subr.mxu0 0.0
    %306 = vmatpush1.msra.mxu0 0.0
    %307 = vmatprep.subr.mxu0 0.0
    %308 = vmatpush1.msra.mxu0 0.0
    %309 = vmatprep.subr.mxu0 0.0
    %310 = vmatpush1.msra.mxu0 0.0
    %311 = vmatprep.mubr.f32.mxu0 0.0
    %312 = vmatmul.mubr.f32.gmra.mrb[0].mxu0 %v242
    %v313 = vpop.f32.mrb[0].mxu0
    %v314 = vadd.f32 0.0, %v313
    %v315 = vpop.f32.mrb[0].mxu0
    %316 = vdwg.mxu0
    %v317 = vadd.f32 %v236, %v314
    %v318 = vld [vmem:[%s6] sm:$0x1]
    %v320 = vlaneseq
    %v321 = vshrl.u32 %v320, 7
    %v322 = vsub.s32 0, %v321
    %v323 = vrot.slane %v318, %v322
    %v325 = vadd.f32 %v317, %v323
    %v326 = vld [vmem:[%s7] sm:$0x1]
    %v327 = vld [vmem:[%s8] sm:$0x1]
    %v328 = vrot.slane %v325, 4
    %v329 = vadd.f32 %v325, %v328
    %v330 = vrot.slane %v329, 2
    %v331 = vadd.f32 %v329, %v330
    %v332 = vrot.slane %v331, 1
    %v333 = vadd.f32 %v331, %v332
    %v334 = vmul.f32 %v333, 0.125
    %v335 = vmul.f32 %v325, %v325
    %v336 = vrot.slane %v335, 4
    %v337 = vadd.f32 %v335, %v336
    %v338 = vrot.slane %v337, 2
    %v339 = vadd.f32 %v337, %v338
    %v340 = vrot.slane %v339, 1
    %v341 = vadd.f32 %v339, %v340
    %v342 = vmul.f32 %v341, 0.125
    %v343 = vmul.f32 %v334, %v334
    %v344 = vsub.f32 %v342, %v343
    %v345 = vadd.f32 %v344, 1e-05
    %v346 = vrsqrt.pop %v345
    %v347 = vmul.f32 %v326, %v346
    %v348 = vmul.f32 %v334, %v347
    %v349 = vsub.f32 %v327, %v348
    %v351 = vlaneseq
    %v352 = vshrl.u32 %v351, 7
    %v353 = vsub.s32 0, %v352
    %v354 = vrot.slane %v347, %v353
    %v356 = vmul.f32 %v325, %v354
    %v358 = vlaneseq
    %v359 = vshrl.u32 %v358, 7
    %v360 = vsub.s32 0, %v359
    %v361 = vrot.slane %v349, %v360
    %v363 = vadd.f32 %v356, %v361
    %v364 = vmax.f32 %v363, 0.0
    %v365 = vld [vmem:[#allocation2] sm:$0xff]
    %v366 = vld [vmem:[#allocation2 + $0x8] sm:$0xff]
    %v367 = vld [vmem:[#allocation2 + $0x10] sm:$0xff]
    %v368 = vld [vmem:[#allocation2 + $0x18] sm:$0xff]
    %v369 = vld [vmem:[#allocation2 + $0x20] sm:$0xff]
    %v370 = vld [vmem:[#allocation2 + $0x28] sm:$0xff]
    %v371 = vld [vmem:[#allocation2 + $0x30] sm:$0xff]
    %v372 = vld [vmem:[#allocation2 + $0x38] sm:$0xff]
    %v373 = vld [vmem:[#allocation2 + $0x40] sm:$0xff]
    %v374 = vld [vmem:[#allocation2 + $0x48] sm:$0xff]
    %v375 = vld [vmem:[#allocation2 + $0x50] sm:$0xff]
    %v376 = vld [vmem:[#allocation2 + $0x58] sm:$0xff]
    %v377 = vld [vmem:[#allocation2 + $0x60] sm:$0xff]
    %v378 = vld [vmem:[#allocation2 + $0x68] sm:$0xff]
    %v379 = vld [vmem:[#allocation2 + $0x70] sm:$0xff]
    %v380 = vld [vmem:[#allocation2 + $0x78] sm:$0xff]
    %v381 = vld [vmem:[%s10] sm:$0x1]
    %v383 = vlaneseq
    %v384 = vshrl.u32 %v383, 7
    %v385 = vsub.s32 0, %v384
    %v386 = vrot.slane %v381, %v385
    %388 = vmatprep.subr.mxu0 0.0
    %389 = vmatpush1.msra.mxu0 %v365
    %390 = vmatprep.subr.mxu0 0.0
    %391 = vmatpush1.msra.mxu0 %v366
    %392 = vmatprep.subr.mxu0 0.0
    %393 = vmatpush1.msra.mxu0 %v367
    %394 = vmatprep.subr.mxu0 0.0
    %395 = vmatpush1.msra.mxu0 %v368
    %396 = vmatprep.subr.mxu0 0.0
    %397 = vmatpush1.msra.mxu0 %v369
    %398 = vmatprep.subr.mxu0 0.0
    %399 = vmatpush1.msra.mxu0 %v370
    %400 = vmatprep.subr.mxu0 0.0
    %401 = vmatpush1.msra.mxu0 %v371
    %402 = vmatprep.subr.mxu0 0.0
    %403 = vmatpush1.msra.mxu0 %v372
    %404 = vmatprep.subr.mxu0 0.0
    %405 = vmatpush1.msra.mxu0 %v373
    %406 = vmatprep.subr.mxu0 0.0
    %407 = vmatpush1.msra.mxu0 %v374
    %408 = vmatprep.subr.mxu0 0.0
    %409 = vmatpush1.msra.mxu0 %v375
    %410 = vmatprep.subr.mxu0 0.0
    %411 = vmatpush1.msra.mxu0 %v376
    %412 = vmatprep.subr.mxu0 0.0
    %413 = vmatpush1.msra.mxu0 %v377
    %414 = vmatprep.subr.mxu0 0.0
    %415 = vmatpush1.msra.mxu0 %v378
    %416 = vmatprep.subr.mxu0 0.0
    %417 = vmatpush1.msra.mxu0 %v379
    %418 = vmatprep.subr.mxu0 0.0
    %419 = vmatpush1.msra.mxu0 %v380
    %420 = vmatprep.subr.mxu0 0.0
    %421 = vmatpush1.msra.mxu0 0.0
    %422 = vmatprep.subr.mxu0 0.0
    %423 = vmatpush1.msra.mxu0 0.0
    %424 = vmatprep.subr.mxu0 0.0
    %425 = vmatpush1.msra.mxu0 0.0
    %426 = vmatprep.subr.mxu0 0.0
    %427 = vmatpush1.msra.mxu0 0.0
    %428 = vmatprep.subr.mxu0 0.0
    %429 = vmatpush1.msra.mxu0 0.0
    %430 = vmatprep.subr.mxu0 0.0
    %431 = vmatpush1.msra.mxu0 0.0
    %432 = vmatprep.subr.mxu0 0.0
    %433 = vmatpush1.msra.mxu0 0.0
    %434 = vmatprep.subr.mxu0 0.0
    %435 = vmatpush1.msra.mxu0 0.0
    %436 = vmatprep.subr.mxu0 0.0
    %437 = vmatpush1.msra.mxu0 0.0
    %438 = vmatprep.subr.mxu0 0.0
    %439 = vmatpush1.msra.mxu0 0.0
    %440 = vmatprep.subr.mxu0 0.0
    %441 = vmatpush1.msra.mxu0 0.0
    %442 = vmatprep.subr.mxu0 0.0
    %443 = vmatpush1.msra.mxu0 0.0
    %444 = vmatprep.subr.mxu0 0.0
    %445 = vmatpush1.msra.mxu0 0.0
    %446 = vmatprep.subr.mxu0 0.0
    %447 = vmatpush1.msra.mxu0 0.0
    %448 = vmatprep.subr.mxu0 0.0
    %449 = vmatpush1.msra.mxu0 0.0
    %450 = vmatprep.subr.mxu0 0.0
    %451 = vmatpush1.msra.mxu0 0.0
    %452 = vmatprep.mubr.f32.mxu0 0.0
    %453 = vmatmul.mubr.f32.gmra.mrb[0].mxu0 %v364
    %v454 = vpop.f32.mrb[0].mxu0
    %v455 = vadd.f32 %v386, %v454
    %v456 = vpop.f32.mrb[0].mxu0
    %457 = vdwg.mxu0
    %v458 = vld [vmem:[%s11] sm:$0x1]
    %v459 = vld [vmem:[%s12] sm:$0x1]
    %v460 = vrot.slane %v455, 4
    %v461 = vadd.f32 %v455, %v460
    %v462 = vrot.slane %v461, 2
    %v463 = vadd.f32 %v461, %v462
    %v464 = vrot.slane %v463, 1
    %v465 = vadd.f32 %v463, %v464
    %v466 = vmul.f32 %v465, 0.125
    %v467 = vmul.f32 %v455, %v455
    %v468 = vrot.slane %v467, 4
    %v469 = vadd.f32 %v467, %v468
    %v470 = vrot.slane %v469, 2
    %v471 = vadd.f32 %v469, %v470
    %v472 = vrot.slane %v471, 1
    %v473 = vadd.f32 %v471, %v472
    %v474 = vmul.f32 %v473, 0.125
    %v475 = vmul.f32 %v466, %v466
    %v476 = vsub.f32 %v474, %v475
    %v477 = vadd.f32 %v476, 1e-05
    %v478 = vrsqrt.pop %v477
    %v479 = vmul.f32 %v458, %v478
    %v480 = vmul.f32 %v466, %v479
    %v481 = vsub.f32 %v459, %v480
    %v483 = vlaneseq
    %v484 = vshrl.u32 %v483, 7
    %v485 = vsub.s32 0, %v484
    %v486 = vrot.slane %v479, %v485
    %v488 = vmul.f32 %v455, %v486
    %v490 = vlaneseq
    %v491 = vshrl.u32 %v490, 7
    %v492 = vsub.s32 0, %v491
    %v493 = vrot.slane %v481, %v492
    %v495 = vadd.f32 %v488, %v493
    %v496 = vmax.f32 %v495, 0.0
    %v497 = vld [vmem:[#allocation5] sm:$0xff]
    %v498 = vld [vmem:[#allocation5 + $0x8] sm:$0xff]
    %v499 = vld [vmem:[#allocation5 + $0x10] sm:$0xff]
    %v500 = vld [vmem:[#allocation5 + $0x18] sm:$0xff]
    %v501 = vld [vmem:[#allocation5 + $0x20] sm:$0xff]
    %v502 = vld [vmem:[#allocation5 + $0x28] sm:$0xff]
    %v503 = vld [vmem:[#allocation5 + $0x30] sm:$0xff]
    %v504 = vld [vmem:[#allocation5 + $0x38] sm:$0xff]
    %v505 = vld [vmem:[#allocation5 + $0x40] sm:$0xff]
    %v506 = vld [vmem:[#allocation5 + $0x48] sm:$0xff]
    %v507 = vld [vmem:[#allocation5 + $0x50] sm:$0xff]
    %v508 = vld [vmem:[#allocation5 + $0x58] sm:$0xff]
    %v509 = vld [vmem:[#allocation5 + $0x60] sm:$0xff]
    %v510 = vld [vmem:[#allocation5 + $0x68] sm:$0xff]
    %v511 = vld [vmem:[#allocation5 + $0x70] sm:$0xff]
    %v512 = vld [vmem:[#allocation5 + $0x78] sm:$0xff]
    %v513 = vld [vmem:[%s14] sm:$0x1]
    %v515 = vlaneseq
    %v516 = vshrl.u32 %v515, 7
    %v517 = vsub.s32 0, %v516
    %v518 = vrot.slane %v513, %v517
    %520 = vmatprep.subr.mxu0 0.0
    %521 = vmatpush1.msra.mxu0 %v497
    %522 = vmatprep.subr.mxu0 0.0
    %523 = vmatpush1.msra.mxu0 %v498
    %524 = vmatprep.subr.mxu0 0.0
    %525 = vmatpush1.msra.mxu0 %v499
    %526 = vmatprep.subr.mxu0 0.0
    %527 = vmatpush1.msra.mxu0 %v500
    %528 = vmatprep.subr.mxu0 0.0
    %529 = vmatpush1.msra.mxu0 %v501
    %530 = vmatprep.subr.mxu0 0.0
    %531 = vmatpush1.msra.mxu0 %v502
    %532 = vmatprep.subr.mxu0 0.0
    %533 = vmatpush1.msra.mxu0 %v503
    %534 = vmatprep.subr.mxu0 0.0
    %535 = vmatpush1.msra.mxu0 %v504
    %536 = vmatprep.subr.mxu0 0.0
    %537 = vmatpush1.msra.mxu0 %v505
    %538 = vmatprep.subr.mxu0 0.0
    %539 = vmatpush1.msra.mxu0 %v506
    %540 = vmatprep.subr.mxu0 0.0
    %541 = vmatpush1.msra.mxu0 %v507
    %542 = vmatprep.subr.mxu0 0.0
    %543 = vmatpush1.msra.mxu0 %v508
    %544 = vmatprep.subr.mxu0 0.0
    %545 = vmatpush1.msra.mxu0 %v509
    %546 = vmatprep.subr.mxu0 0.0
    %547 = vmatpush1.msra.mxu0 %v510
    %548 = vmatprep.subr.mxu0 0.0
    %549 = vmatpush1.msra.mxu0 %v511
    %550 = vmatprep.subr.mxu0 0.0
    %551 = vmatpush1.msra.mxu0 %v512
    %552 = vmatprep.subr.mxu0 0.0
    %553 = vmatpush1.msra.mxu0 0.0
    %554 = vmatprep.subr.mxu0 0.0
    %555 = vmatpush1.msra.mxu0 0.0
    %556 = vmatprep.subr.mxu0 0.0
    %557 = vmatpush1.msra.mxu0 0.0
    %558 = vmatprep.subr.mxu0 0.0
    %559 = vmatpush1.msra.mxu0 0.0
    %560 = vmatprep.subr.mxu0 0.0
    %561 = vmatpush1.msra.mxu0 0.0
    %562 = vmatprep.subr.mxu0 0.0
    %563 = vmatpush1.msra.mxu0 0.0
    %564 = vmatprep.subr.mxu0 0.0
    %565 = vmatpush1.msra.mxu0 0.0
    %566 = vmatprep.subr.mxu0 0.0
    %567 = vmatpush1.msra.mxu0 0.0
    %568 = vmatprep.subr.mxu0 0.0
    %569 = vmatpush1.msra.mxu0 0.0
    %570 = vmatprep.subr.mxu0 0.0
    %571 = vmatpush1.msra.mxu0 0.0
    %572 = vmatprep.subr.mxu0 0.0
    %573 = vmatpush1.msra.mxu0 0.0
    %574 = vmatprep.subr.mxu0 0.0
    %575 = vmatpush1.msra.mxu0 0.0
    %576 = vmatprep.subr.mxu0 0.0
    %577 = vmatpush1.msra.mxu0 0.0
    %578 = vmatprep.subr.mxu0 0.0
    %579 = vmatpush1.msra.mxu0 0.0
    %580 = vmatprep.subr.mxu0 0.0
    %581 = vmatpush1.msra.mxu0 0.0
    %582 = vmatprep.subr.mxu0 0.0
    %583 = vmatpush1.msra.mxu0 0.0
    %584 = vmatprep.mubr.f32.mxu0 0.0
    %585 = vmatmul.mubr.f32.gmra.mrb[0].mxu0 %v496
    %v586 = vpop.f32.mrb[0].mxu0
    %v587 = vadd.f32 %v518, %v586
    %v588 = vpop.f32.mrb[0].mxu0
    %589 = vdwg.mxu0
    %590 = vst [vmem:[#allocation7] sm:$0xff] %v587
    // Predicated region
    $region70: #{tpu_custom_call.1} parent=1 // pred_check
      _
    $region71: #{tpu_custom_call.1} parent=1 // pred_check_branch
      %592 = sbr.rel (0) target = $region73
    $region72: #{tpu_custom_call.1} parent=1 // pred_region
      %s594 = ssub.s32 128, 128
      %595 = vsyncadd [#allocation4], %s594
      %s597 = sshll.u32 [#allocation7], 4
      %s598 = int_to_ptr.vmem [resolvable:$true] %s597
      %600 = dma.vmem_to_hbm [thread:$0]  %s598, 128, %s15, [#allocation4]
    $region73: #{tpu_custom_call.1} parent=1 // pred_fallthru
      _
    // Predicated region
    $region74: #{tpu_custom_call.1} parent=1 // pred_check
      _
    $region75: #{tpu_custom_call.1} parent=1 // pred_check_branch
      %602 = sbr.rel (0) target = $region77
    $region76: #{tpu_custom_call.1} parent=1 // pred_region
      %603 = dma.done [#allocation4], 128
    $region77: #{tpu_custom_call.1} parent=1 // pred_fallthru
      _
    %604 = vsyncpa [#allocation3], 1
    %605 = vsyncpa [#allocation6], 1
    %606 = vsyncpa [#allocation4], 1

</llo_original>
